<compile_context>
chip_gen: v5e
topology: v5e:2x2
jax: 0.10.0
libtpu: 0.0.40
codegen_flags: <defaults>
</compile_context>

<pallas_src>
import numpy as np
import jax
import jax.numpy as jnp
from jax.experimental import pallas as pl
from jax.experimental.pallas import tpu as pltpu


def residual_conv_kernel(x_ref, w_ref, b_ref, o_ref):
    """Fused Residual(Conv3x3 + bias + ReLU) on a lane-packed activation slab.

    x_ref: (H, B*W*C)        f32 activation (lanes = batch-major, chan fastest)
    w_ref: (B*W*C, 3*B*W*C)  bf16 fused banded conv weights (3 kh panels on N)
    b_ref: (1, B*W*C)        f32 bias tiled over B*W
    o_ref: (H, B*W*C)        f32 output = fn(x) + x
    """
    H, BWC = x_ref.shape
    x = x_ref[...]                                  # (H, BWC) f32, loaded once
    xb = x.astype(jnp.bfloat16)                     # MXU operands in bf16

    # One wide MXU dot: all 3 kh taps, all kw taps (banded), all batches
    # (block-diagonal) at once.  (16,128) x (128,384) -> (16,384) f32.
    r = jnp.dot(xb, w_ref[...], preferred_element_type=jnp.float32)

    # Split into the three 128-lane kh panels (vreg-aligned slices).
    r0 = r[:, 0 * BWC:1 * BWC]          # kh = 0 (row above)
    r1 = r[:, 1 * BWC:2 * BWC]          # kh = 1 (same row)
    r2 = r[:, 2 * BWC:3 * BWC]          # kh = 2 (row below)

    # Height taps as XLU sublane rolls + zero-fill at the image border
    # (replaces the two f32 shift matmuls).
    row = jax.lax.broadcasted_iota(jnp.int32, (H, BWC), 0)
    down = jnp.where(row == 0, 0.0, pltpu.roll(r0, shift=1, axis=0))
    up = jnp.where(row == H - 1, 0.0, pltpu.roll(r2, shift=H - 1, axis=0))
    y = down + r1 + up

    y = jnp.maximum(y + b_ref[...], 0.0)            # bias + ReLU  (the fn)
    o_ref[...] = (y + x).astype(o_ref.dtype)        # residual: fn(x) + x


def build_residual_params(w, b, batch, width):
    """Fold a (3,3,Cin,Cout) conv into one fused banded matrix + bias row.

    Wband[kh][(j', ci), (j, co)] = w[kh, kw, ci, co]  with  j' = j + kw - 1
    (zero outside the band) performs the width-direction SAME conv as a
    matmul.  kron(I_B, Wband[kh]) makes it block-diagonal over the batch
    packed into the lane axis; the three kh panels are concatenated along N.
    """
    wnp = np.asarray(w, np.float32)
    C = wnp.shape[2]
    WC = width * C
    wband = np.zeros((3, WC, WC), np.float32)
    for kh in range(3):
        for kw in range(3):
            wband[kh] += np.kron(np.eye(width, k=1 - kw, dtype=np.float32),
                                 wnp[kh, kw])
    eye_b = np.eye(batch, dtype=np.float32)
    wcat = np.concatenate([np.kron(eye_b, wband[kh]) for kh in range(3)],
                          axis=1)                       # (B*WC, 3*B*WC)
    brow = np.tile(np.asarray(b, np.float32), batch * width).reshape(1, batch * WC)
    return jnp.asarray(wcat, jnp.bfloat16), jnp.asarray(brow, jnp.float32)


@jax.jit
def residual_forward(x_nchw, wcat, brow):
    """Residual(fn).forward with fn = Conv2d(C,C,3,padding=1) + ReLU.

    x_nchw: (B, C, H, W) f32.  Returns (B, C, H, W) f32 == fn(x) + x.
    """
    B, C, H, W = x_nchw.shape
    BWC = B * W * C
    # NCHW -> (H, B, W, C) -> (H, B*W*C): batch packed into the 128-lane axis,
    # channels fastest, so the fused banded matmul contracts one dense K axis
    # and every vector op / store uses full 128-lane vregs.
    x2 = jnp.transpose(x_nchw, (2, 0, 3, 1)).reshape(H, BWC)

    out2 = pl.pallas_call(
        residual_conv_kernel,
        out_shape=jax.ShapeDtypeStruct((H, BWC), jnp.float32),
        grid=(1,),
        in_specs=[
            pl.BlockSpec((H, BWC), lambda i: (0, 0)),
            pl.BlockSpec((BWC, 3 * BWC), lambda i: (0, 0)),
            pl.BlockSpec((1, BWC), lambda i: (0, 0)),
        ],
        out_specs=pl.BlockSpec((H, BWC), lambda i: (0, 0)),
        compiler_params=pltpu.CompilerParams(
            dimension_semantics=("arbitrary",),
            vmem_limit_bytes=16 * 1024 * 1024,
        ),
    )(x2, wcat, brow)

    # (H, B*W*C) -> (H, B, W, C) -> NCHW (module preserves the input layout).
    return jnp.transpose(out2.reshape(H, B, W, C), (1, 3, 0, 2))


if __name__ == "__main__":
    key = jax.random.PRNGKey(0)
    k_x, k_w, k_b = jax.random.split(key, 3)

    B, C, H, W = 2, 4, 16, 16
    x = jax.random.normal(k_x, (B, C, H, W), jnp.float32)      # NCHW, like PyTorch
    w = jax.random.normal(k_w, (3, 3, C, C), jnp.float32) / np.sqrt(9 * C)
    b = 0.01 * jax.random.normal(k_b, (C,), jnp.float32)

    wcat, brow = build_residual_params(w, b, batch=B, width=W)   # hoisted once
    out = jax.block_until_ready(residual_forward(x, wcat, brow))
    assert out.shape == (B, C, H, W), out.shape
    assert out.dtype == jnp.float32

    # Pure-JAX f32 reference:  fn(x) + x  with fn = conv3x3(same) + bias + ReLU.
    x_nhwc = jnp.transpose(x, (0, 2, 3, 1))
    conv = jax.lax.conv_general_dilated(
        x_nhwc, w, window_strides=(1, 1), padding="SAME",
        dimension_numbers=("NHWC", "HWIO", "NHWC"))
    ref = jnp.maximum(conv + b[None, None, None, :], 0.0) + x_nhwc
    ref = jnp.transpose(ref, (0, 3, 1, 2))
    err = float(jnp.max(jnp.abs(out - ref)))
    assert err < 5e-2, f"max abs err vs reference: {err}"   # bf16 MXU tolerance

    print("KERNEL_OK")
</pallas_src>

<mosaic_0001>
module attributes {stable_mosaic.version = 11 : i64} {
  func.func @residual_conv_kernel(%arg0: i32, %arg1: memref<16x128xf32, #tpu.memory_space<vmem>>, %arg2: memref<128x384xbf16, #tpu.memory_space<vmem>>, %arg3: memref<1x128xf32, #tpu.memory_space<vmem>>, %arg4: memref<16x128xf32, #tpu.memory_space<vmem>>) attributes {dimension_semantics = [#tpu.dimension_semantics<arbitrary>], iteration_bounds = array<i64: 1>, scalar_prefetch = 0 : i64, scratch_operands = 0 : i64, tpu.core_type = #tpu.core_type<tc>, window_params = [{pipeline_mode = #tpu.pipeline_mode<synchronous>, transform_indices = @transform_0, window_bounds = array<i64: 16, 128>}, {pipeline_mode = #tpu.pipeline_mode<synchronous>, transform_indices = @transform_1, window_bounds = array<i64: 128, 384>}, {pipeline_mode = #tpu.pipeline_mode<synchronous>, transform_indices = @transform_2, window_bounds = array<i64: 1, 128>}, {pipeline_mode = #tpu.pipeline_mode<synchronous>, transform_indices = @transform_3, window_bounds = array<i64: 16, 128>}]} {
    %c0 = arith.constant 0 : index
    %c0_0 = arith.constant 0 : index
    %0 = vector.load %arg1[%c0, %c0_0] : memref<16x128xf32, #tpu.memory_space<vmem>>, vector<16x128xf32>
    %1 = arith.truncf %0 : vector<16x128xf32> to vector<16x128xbf16>
    %c0_1 = arith.constant 0 : index
    %c0_2 = arith.constant 0 : index
    %2 = vector.load %arg2[%c0_1, %c0_2] : memref<128x384xbf16, #tpu.memory_space<vmem>>, vector<128x384xbf16>
    %cst = arith.constant dense<0.000000e+00> : vector<16x384xf32>
    %3 = tpu.matmul %1, %2, %cst {dimension_numbers = #tpu.dot_dimension_numbers<[1], [0], [0], [1], [0, 0, 1, 1], [], []>} : vector<16x128xbf16>, vector<128x384xbf16>, vector<16x384xf32> -> vector<16x384xf32>
    %4 = vector.extract_strided_slice %3 {offsets = [0, 0], sizes = [16, 128], strides = [1, 1]} : vector<16x384xf32> to vector<16x128xf32>
    %5 = vector.extract_strided_slice %3 {offsets = [0, 128], sizes = [16, 128], strides = [1, 1]} : vector<16x384xf32> to vector<16x128xf32>
    %6 = vector.extract_strided_slice %3 {offsets = [0, 256], sizes = [16, 128], strides = [1, 1]} : vector<16x384xf32> to vector<16x128xf32>
    %7 = tpu.iota {dimensions = array<i32: 0>} : vector<16x128xi32>
    %c0_i32 = arith.constant 0 : i32
    %8 = vector.broadcast %c0_i32 : i32 to vector<16x128xi32>
    %9 = arith.cmpi eq, %7, %8 : vector<16x128xi32>
    %c1_i32 = arith.constant 1 : i32
    %10 = tpu.dynamic_rotate %4 by %c1_i32 dim 0 : vector<16x128xf32>, i32 -> vector<16x128xf32>
    %cst_3 = arith.constant 0.000000e+00 : f32
    %11 = vector.broadcast %cst_3 : f32 to vector<16x128xf32>
    %12 = arith.select %9, %11, %10 : vector<16x128xi1>, vector<16x128xf32>
    %c15_i32 = arith.constant 15 : i32
    %13 = vector.broadcast %c15_i32 : i32 to vector<16x128xi32>
    %14 = arith.cmpi eq, %7, %13 : vector<16x128xi32>
    %c15_i32_4 = arith.constant 15 : i32
    %15 = tpu.dynamic_rotate %6 by %c15_i32_4 dim 0 : vector<16x128xf32>, i32 -> vector<16x128xf32>
    %cst_5 = arith.constant 0.000000e+00 : f32
    %16 = vector.broadcast %cst_5 : f32 to vector<16x128xf32>
    %17 = arith.select %14, %16, %15 : vector<16x128xi1>, vector<16x128xf32>
    %18 = arith.addf %12, %5 : vector<16x128xf32>
    %19 = arith.addf %18, %17 : vector<16x128xf32>
    %c0_6 = arith.constant 0 : index
    %c0_7 = arith.constant 0 : index
    %20 = vector.load %arg3[%c0_6, %c0_7] : memref<1x128xf32, #tpu.memory_space<vmem>>, vector<1x128xf32>
    %21 = vector.broadcast %20 : vector<1x128xf32> to vector<16x128xf32>
    %22 = arith.addf %19, %21 : vector<16x128xf32>
    %cst_8 = arith.constant 0.000000e+00 : f32
    %23 = vector.broadcast %cst_8 : f32 to vector<16x128xf32>
    %24 = arith.maximumf %22, %23 : vector<16x128xf32>
    %25 = arith.addf %24, %0 : vector<16x128xf32>
    %c0_9 = arith.constant 0 : index
    %c0_10 = arith.constant 0 : index
    %26 = vector.load %arg4[%c0_9, %c0_10] : memref<16x128xf32, #tpu.memory_space<vmem>>, vector<16x128xf32>
    tpu.vector_store %arg4[%c0_9, %c0_10], %25 {strides = array<i32>} : memref<16x128xf32, #tpu.memory_space<vmem>>, vector<16x128xf32>,
    return
  }
  func.func @transform_0(%arg0: i32) -> (i32, i32) {
    %c0_i32 = arith.constant 0 : i32
    %c0_i32_0 = arith.constant 0 : i32
    %c0_i32_1 = arith.constant 0 : i32
    return %c0_i32, %c0_i32_0 : i32, i32
  }
  func.func @transform_1(%arg0: i32) -> (i32, i32) {
    %c0_i32 = arith.constant 0 : i32
    %c0_i32_0 = arith.constant 0 : i32
    %c0_i32_1 = arith.constant 0 : i32
    return %c0_i32, %c0_i32_0 : i32, i32
  }
  func.func @transform_2(%arg0: i32) -> (i32, i32) {
    %c0_i32 = arith.constant 0 : i32
    %c0_i32_0 = arith.constant 0 : i32
    %c0_i32_1 = arith.constant 0 : i32
    return %c0_i32, %c0_i32_0 : i32, i32
  }
  func.func @transform_3(%arg0: i32) -> (i32, i32) {
    %c0_i32 = arith.constant 0 : i32
    %c0_i32_0 = arith.constant 0 : i32
    %c0_i32_1 = arith.constant 0 : i32
    return %c0_i32, %c0_i32_0 : i32, i32
  }
}

</mosaic_0001>

<llo_original>
// kernel: residual_forward.1
$region0: #{residual_forward.1}
  #allocation0 [shape = 'u32[]', space=smem, size = 0x4, offset = 0x4, fixed_abs, tag = 'smem constant byte address 0x4 - core index']
  #allocation1 [shape = 'u32[72,128]{1,0:T(1,128)}', space=vmem, size = 0x9000, scoped, tag = 'internal scratch']
  %s0 = inlined_call_operand.vmem [shape: f32[16,128], index: 0, kind: input, shape index: {}]
  %s1 = inlined_call_operand.vmem [shape: bf16[128,384], index: 1, kind: input, shape index: {}]
  %s2 = inlined_call_operand.vmem [shape: f32[1,128], index: 2, kind: input, shape index: {}]
  %s3 = inlined_call_operand.vmem [shape: f32[16,128], index: 3, kind: output, shape index: {}]
  %s4 = sld [smem:[#allocation0]]
  $region22: #{residual_forward.1} parent=0
    _
  %s6 = ssub.s32 1, %s4
  %s7 = scalar_select 0, %s6, %s4
  // Predicated region
  $region2: #{residual_forward.1} parent=0 // pred_check
    _
  $region3: #{residual_forward.1} parent=0 // pred_check_branch
    %9 = sbr.rel (0) target = $region5
  $region4: #{residual_forward.1} parent=0 // pred_region
    _
  $region5: #{residual_forward.1} parent=0 // pred_fallthru
    _
  // Predicated region
  $region6: #{residual_forward.1} parent=0 // pred_check
    _
  $region7: #{residual_forward.1} parent=0 // pred_check_branch
    %11 = sbr.rel (0) target = $region9
  $region8: #{residual_forward.1} parent=0 // pred_region
    _
  $region9: #{residual_forward.1} parent=0 // pred_fallthru
    _
  // Predicated region
  $region10: #{residual_forward.1} parent=0 // pred_check
    _
  $region11: #{residual_forward.1} parent=0 // pred_check_branch
    %13 = sbr.rel (0) target = $region13
  $region12: #{residual_forward.1} parent=0 // pred_region
    _
  $region13: #{residual_forward.1} parent=0 // pred_fallthru
    _
  %v14 = vld [vmem:[%s0] sm:$0xff]
  %v15 = vld [vmem:[%s0 + $0x8] sm:$0xff]
  %v16 = vpack.c.bf16 %v15, %v14
  %v17 = vld [vmem:[%s1] sm:$0xff]
  %v18 = vld [vmem:[%s1 + $0x8] sm:$0xf]
  %v19 = vld [vmem:[%s1 + $0xc] sm:$0xff]
  %v20 = vld [vmem:[%s1 + $0x14] sm:$0xf]
  %v21 = vld [vmem:[%s1 + $0x18] sm:$0xff]
  %v22 = vld [vmem:[%s1 + $0x20] sm:$0xf]
  %v23 = vld [vmem:[%s1 + $0x24] sm:$0xff]
  %v24 = vld [vmem:[%s1 + $0x2c] sm:$0xf]
  %v25 = vld [vmem:[%s1 + $0x30] sm:$0xff]
  %v26 = vld [vmem:[%s1 + $0x38] sm:$0xf]
  %v27 = vld [vmem:[%s1 + $0x3c] sm:$0xff]
  %v28 = vld [vmem:[%s1 + $0x44] sm:$0xf]
  %v29 = vld [vmem:[%s1 + $0x48] sm:$0xff]
  %v30 = vld [vmem:[%s1 + $0x50] sm:$0xf]
  %v31 = vld [vmem:[%s1 + $0x54] sm:$0xff]
  %v32 = vld [vmem:[%s1 + $0x5c] sm:$0xf]
  %v33 = vld [vmem:[%s1 + $0x60] sm:$0xff]
  %v34 = vld [vmem:[%s1 + $0x68] sm:$0xf]
  %v35 = vld [vmem:[%s1 + $0x6c] sm:$0xff]
  %v36 = vld [vmem:[%s1 + $0x74] sm:$0xf]
  %v37 = vld [vmem:[%s1 + $0x78] sm:$0xff]
  %v38 = vld [vmem:[%s1 + $0x80] sm:$0xf]
  %v39 = vld [vmem:[%s1 + $0x84] sm:$0xff]
  %v40 = vld [vmem:[%s1 + $0x8c] sm:$0xf]
  %v41 = vld [vmem:[%s1 + $0x90] sm:$0xff]
  %v42 = vld [vmem:[%s1 + $0x98] sm:$0xf]
  %v43 = vld [vmem:[%s1 + $0x9c] sm:$0xff]
  %v44 = vld [vmem:[%s1 + $0xa4] sm:$0xf]
  %v45 = vld [vmem:[%s1 + $0xa8] sm:$0xff]
  %v46 = vld [vmem:[%s1 + $0xb0] sm:$0xf]
  %v47 = vld [vmem:[%s1 + $0xb4] sm:$0xff]
  %v48 = vld [vmem:[%s1 + $0xbc] sm:$0xf]
  %v81 = vunpack.c.l.b16 %v17
  %v82 = vunpack.c.h.b16 %v17
  %v83 = vunpack.c.l.b16 %v18
  %v84 = vunpack.c.l.b16 %v19
  %v85 = vunpack.c.h.b16 %v19
  %v86 = vunpack.c.l.b16 %v20
  %v87 = vunpack.c.l.b16 %v21
  %v88 = vunpack.c.h.b16 %v21
  %v89 = vunpack.c.l.b16 %v22
  %v90 = vunpack.c.l.b16 %v23
  %v91 = vunpack.c.h.b16 %v23
  %v92 = vunpack.c.l.b16 %v24
  %v93 = vunpack.c.l.b16 %v25
  %v94 = vunpack.c.h.b16 %v25
  %v95 = vunpack.c.l.b16 %v26
  %v96 = vunpack.c.l.b16 %v27
  %v97 = vunpack.c.h.b16 %v27
  %v98 = vunpack.c.l.b16 %v28
  %v99 = vunpack.c.l.b16 %v29
  %v100 = vunpack.c.h.b16 %v29
  %v101 = vunpack.c.l.b16 %v30
  %v102 = vunpack.c.l.b16 %v31
  %v103 = vunpack.c.h.b16 %v31
  %v104 = vunpack.c.l.b16 %v32
  %v105 = vunpack.c.l.b16 %v33
  %v106 = vunpack.c.h.b16 %v33
  %v107 = vunpack.c.l.b16 %v34
  %v108 = vunpack.c.l.b16 %v35
  %v109 = vunpack.c.h.b16 %v35
  %v110 = vunpack.c.l.b16 %v36
  %v111 = vunpack.c.l.b16 %v37
  %v112 = vunpack.c.h.b16 %v37
  %v113 = vunpack.c.l.b16 %v38
  %v114 = vunpack.c.l.b16 %v39
  %v115 = vunpack.c.h.b16 %v39
  %v116 = vunpack.c.l.b16 %v40
  %v117 = vunpack.c.l.b16 %v41
  %v118 = vunpack.c.h.b16 %v41
  %v119 = vunpack.c.l.b16 %v42
  %v120 = vunpack.c.l.b16 %v43
  %v121 = vunpack.c.h.b16 %v43
  %v122 = vunpack.c.l.b16 %v44
  %v123 = vunpack.c.l.b16 %v45
  %v124 = vunpack.c.h.b16 %v45
  %v125 = vunpack.c.l.b16 %v46
  %v126 = vunpack.c.l.b16 %v47
  %v127 = vunpack.c.h.b16 %v47
  %v128 = vunpack.c.l.b16 %v48
  %v129 = vpack.c.b16 %v84, %v81
  %v130 = vpack.c.b16 %v85, %v82
  %v131 = vpack.c.b16 %v86, %v83
  %v132 = vpack.c.b16 %v90, %v87
  %v133 = vpack.c.b16 %v91, %v88
  %v134 = vpack.c.b16 %v92, %v89
  %v135 = vpack.c.b16 %v96, %v93
  %v136 = vpack.c.b16 %v97, %v94
  %v137 = vpack.c.b16 %v98, %v95
  %v138 = vpack.c.b16 %v102, %v99
  %v139 = vpack.c.b16 %v103, %v100
  %v140 = vpack.c.b16 %v104, %v101
  %v141 = vpack.c.b16 %v108, %v105
  %v142 = vpack.c.b16 %v109, %v106
  %v143 = vpack.c.b16 %v110, %v107
  %v144 = vpack.c.b16 %v114, %v111
  %v145 = vpack.c.b16 %v115, %v112
  %v146 = vpack.c.b16 %v116, %v113
  %v147 = vpack.c.b16 %v120, %v117
  %v148 = vpack.c.b16 %v121, %v118
  %v149 = vpack.c.b16 %v122, %v119
  %v150 = vpack.c.b16 %v126, %v123
  %v151 = vpack.c.b16 %v127, %v124
  %v152 = vpack.c.b16 %v128, %v125
  %177 = vmatpush.bf16.msra.mxu0 %v150
  %178 = vmatpush.bf16.msra.mxu0 %v147
  %179 = vmatpush.bf16.msra.mxu0 %v144
  %180 = vmatpush.bf16.msra.mxu0 %v141
  %181 = vmatpush.bf16.msra.mxu0 %v138
  %182 = vmatpush.bf16.msra.mxu0 %v135
  %183 = vmatpush.bf16.msra.mxu0 %v132
  %184 = vmatpush.bf16.msra.mxu0 %v129
  %185 = vmatmul.bf16.gmra.mxu0 %v16
  %v186 = vpop.f32.mrf.mxu0
  %v187 = vadd.f32 0.0, %v186
  %v188 = vpop.f32.mrf.mxu0
  %v189 = vadd.f32 0.0, %v188
  %190 = vdwg.mxu0
  %191 = vmatpush.bf16.msra.mxu0 %v151
  %192 = vmatpush.bf16.msra.mxu0 %v148
  %193 = vmatpush.bf16.msra.mxu0 %v145
  %194 = vmatpush.bf16.msra.mxu0 %v142
  %195 = vmatpush.bf16.msra.mxu0 %v139
  %196 = vmatpush.bf16.msra.mxu0 %v136
  %197 = vmatpush.bf16.msra.mxu0 %v133
  %198 = vmatpush.bf16.msra.mxu0 %v130
  %199 = vmatmul.bf16.gmra.mxu0 %v16
  %v200 = vpop.f32.mrf.mxu0
  %v201 = vadd.f32 0.0, %v200
  %v202 = vpop.f32.mrf.mxu0
  %v203 = vadd.f32 0.0, %v202
  %204 = vdwg.mxu0
  %205 = vmatpush.bf16.msra.mxu0 %v152
  %206 = vmatpush.bf16.msra.mxu0 %v149
  %207 = vmatpush.bf16.msra.mxu0 %v146
  %208 = vmatpush.bf16.msra.mxu0 %v143
  %209 = vmatpush.bf16.msra.mxu0 %v140
  %210 = vmatpush.bf16.msra.mxu0 %v137
  %211 = vmatpush.bf16.msra.mxu0 %v134
  %212 = vmatpush.bf16.msra.mxu0 %v131
  %213 = vmatmul.bf16.gmra.mxu0 %v16
  %v214 = vpop.f32.mrf.mxu0
  %v215 = vadd.f32 0.0, %v214
  %v216 = vpop.f32.mrf.mxu0
  %v217 = vadd.f32 0.0, %v216
  %218 = vdwg.mxu0
  %v219 = vlaneseq
  %v220 = vshrl.u32 %v219, 7
  %v221 = vadd.s32 %v220, 8
  %vm222 = vcmp.eq.s32.totalorder %v220, 0
  %vm223 = vcmp.eq.s32.totalorder %v221, 0
  %v224 = vrot.slane %v187, 7
  %v225 = vrot.slane %v189, 7
  %vm226 = vcmp.lt.s32.totalorder %v220, 1
  %v227 = vsel %vm226, %v224, %v225
  %v228 = vsel %vm226, %v225, %v224
  %v229 = vsel %vm222, 0.0, %v228
  %v230 = vsel %vm223, 0.0, %v227
  %vm231 = vcmp.eq.s32.totalorder %v220, 15
  %vm232 = vcmp.eq.s32.totalorder %v221, 15
  %v233 = vrot.slane %v215, 1
  %v234 = vrot.slane %v217, 1
  %vm235 = vcmp.lt.s32.totalorder %v220, 7
  %v236 = vsel %vm235, %v233, %v234
  %v237 = vsel %vm235, %v234, %v233
  %v238 = vsel %vm231, 0.0, %v236
  %v239 = vsel %vm232, 0.0, %v237
  %v240 = vadd.f32 %v229, %v201
  %v241 = vadd.f32 %v230, %v203
  %v242 = vadd.f32 %v240, %v238
  %v243 = vadd.f32 %v241, %v239
  %v244 = vld [vmem:[%s2] sm:$0x1]
  %v246 = vperm.slane %v244, 0
  %v248 = vadd.f32 %v242, %v246
  %v249 = vadd.f32 %v243, %v246
  %v250 = vmax.f32 %v248, 0.0
  %v251 = vmax.f32 %v249, 0.0
  %v252 = vadd.f32 %v250, %v14
  %v253 = vadd.f32 %v251, %v15
  %254 = vst [vmem:[%s3] sm:$0xff] %v252
  %255 = vst [vmem:[%s3 + $0x8] sm:$0xff] %v253
  // Predicated region
  $region14: #{residual_forward.1} parent=0 // pred_check
    _
  $region15: #{residual_forward.1} parent=0 // pred_check_branch
    %257 = sbr.rel (0) target = $region17
  $region16: #{residual_forward.1} parent=0 // pred_region
    _
  $region17: #{residual_forward.1} parent=0 // pred_fallthru
    _
  // Predicated region
  $region18: #{residual_forward.1} parent=0 // pred_check
    _
  $region19: #{residual_forward.1} parent=0 // pred_check_branch
    %259 = sbr.rel (0) target = $region21
  $region20: #{residual_forward.1} parent=0 // pred_region
    _
  $region21: #{residual_forward.1} parent=0 // pred_fallthru
    _

</llo_original>
